<compile_context>
chip_gen: v5e
topology: v5e:2x2
jax: 0.10.0
libtpu: 0.0.40
codegen_flags: <defaults>
</compile_context>

<pallas_src>
import jax
import jax.numpy as jnp
from jax.experimental import pallas as pl
from jax.experimental.pallas import tpu as pltpu


def conv_relu_kernel(x_ref, b_ref, o_ref):
    # x_ref: (Hpad, Cin*W)           bf16  H-padded input rows for one batch element
    # b_ref: (KH, Cin*W, Wout*Cout)  bf16  block-Toeplitz weight slabs (W padding folded in)
    # o_ref: (Hout, Wout*Cout)       f32   lane-dense output slab
    Hout = o_ref.shape[0]
    KH = b_ref.shape[0]
    # kh = 0 initializes the accumulator; remaining taps chain-accumulate in f32.
    acc = jnp.dot(x_ref[pl.ds(0, Hout), :], b_ref[0],
                  preferred_element_type=jnp.float32)
    for kh in range(1, KH):  # static unroll: KH MXU matmuls, K = Cin*W
        acc += jnp.dot(x_ref[pl.ds(kh, Hout), :], b_ref[kh],
                       preferred_element_type=jnp.float32)
    o_ref[...] = jnp.maximum(acc, 0.0)  # fused ReLU, unmasked f32 store


def make_conv_bn_relu_2d(w_oihw, *, padding=1, compute_dtype=jnp.bfloat16):
    """Build ConvBnRelu2d.forward (default config) for a fixed weight.

    w_oihw: (Cout, Cin, KH, KW) float32 PyTorch Conv2d weight (bias=False).
    Returns forward(x_nchw) -> (N, Cout, Hout, Wout) float32.
    The block-Toeplitz weight slab is built once per input width and cached;
    the per-call path is a single jitted XLA program around the Pallas kernel.
    """
    Cout, Cin, KH, KW = w_oihw.shape
    # Module defaults assumed: stride=1, dilation=1, groups=1, bias=False.

    def build_b(W):
        # B[kh, ci*W + wi, wo*Cout + co] = w[co, ci, kh, wi - wo + padding]
        #   if 0 <= wi - wo + padding < KW else 0      (W-side zero padding folded in)
        Wout = W + 2 * padding - KW + 1
        w_hkio = jnp.transpose(w_oihw, (2, 3, 1, 0))                  # (KH, KW, Cin, Cout)
        wi = jnp.arange(W)[None, :, None]
        wo = jnp.arange(Wout)[None, None, :]
        kw = jnp.arange(KW)[:, None, None]
        sel = (wi == wo + kw - padding).astype(w_oihw.dtype)          # (KW, W, Wout)
        b = jnp.einsum('xpq,hxio->hipqo', sel, w_hkio)                # (KH, Cin, W, Wout, Cout)
        return b.reshape(KH, Cin * W, Wout * Cout).astype(compute_dtype)

    b_cache = {}  # per-input-width cache: B depends only on the weight

    @jax.jit
    def _forward(x_nchw, b):
        N, Cin_x, H, W = x_nchw.shape
        assert Cin_x == Cin, "groups != 1 is not supported"
        Hpad = H + 2 * padding
        Hout = Hpad - KH + 1
        Wout = W + 2 * padding - KW + 1

        # Input glue (fused by jit): H-only zero pad, pack (Cin, W) onto lanes.
        x_pad = jnp.pad(x_nchw, ((0, 0), (0, 0), (padding, padding), (0, 0)))
        x_rows = jnp.transpose(x_pad, (0, 2, 1, 3)).reshape(N, Hpad, Cin * W)
        x_rows = x_rows.astype(compute_dtype)

        out_rows = pl.pallas_call(
            conv_relu_kernel,
            out_shape=jax.ShapeDtypeStruct((N, Hout, Wout * Cout), jnp.float32),
            grid=(N,),
            in_specs=[
                # Full H-padded slab per batch element (small at these shapes).
                pl.BlockSpec((None, Hpad, Cin * W), lambda n: (n, 0, 0)),
                # Weight slabs, constant index_map -> DMA'd once, resident.
                pl.BlockSpec((KH, Cin * W, Wout * Cout), lambda n: (0, 0, 0)),
            ],
            out_specs=pl.BlockSpec((None, Hout, Wout * Cout), lambda n: (n, 0, 0)),
            compiler_params=pltpu.CompilerParams(
                dimension_semantics=("parallel",),  # batch axis can shard across v7x's 2 TCs
            ),
        )(x_rows, b)

        # Output glue (fused by jit): unfold lanes, back to NCHW.
        out = out_rows.reshape(N, Hout, Wout, Cout).transpose(0, 3, 1, 2)
        return out.astype(x_nchw.dtype)

    def forward(x_nchw):
        W = x_nchw.shape[3]
        if W not in b_cache:
            b_cache[W] = jax.block_until_ready(build_b(W))  # one-time, hoisted out of per-call path
        return _forward(x_nchw, b_cache[W])

    return forward


if __name__ == "__main__":
    key = jax.random.PRNGKey(0)
    kx, kw = jax.random.split(key)

    # Small shapes consistent with the module: N=2, Cin=4, Cout=8, H=W=16.
    N, Cin, Cout, H, W, K = 2, 4, 8, 16, 16, 3

    x = jax.random.normal(kx, (N, Cin, H, W), dtype=jnp.float32)
    fan_in = Cin * K * K
    bound = (1.0 / fan_in) ** 0.5
    w = jax.random.uniform(kw, (Cout, Cin, K, K), dtype=jnp.float32,
                           minval=-bound, maxval=bound)

    forward = make_conv_bn_relu_2d(w, padding=1)   # builds + caches B once
    out = jax.block_until_ready(forward(x))        # first call: trace + compile
    out = jax.block_until_ready(forward(x))        # steady state: cached jit, cached B
    assert out.shape == (N, Cout, H, W)

    # Reference: XLA native conv + ReLU (f32).
    ref_f32 = jnp.maximum(
        jax.lax.conv_general_dilated(
            x, w, window_strides=(1, 1), padding=((1, 1), (1, 1)),
            dimension_numbers=("NCHW", "OIHW", "NCHW")), 0.0)
    # Loose check vs the f32 reference (kernel feeds bf16 to the MXU, accumulates f32).
    assert jnp.allclose(out, ref_f32, atol=5e-2, rtol=5e-2), "mismatch vs f32 reference"

    # Tight check vs a reference on bf16-rounded operands (same products, f32 accumulation).
    xb = x.astype(jnp.bfloat16).astype(jnp.float32)
    wb = w.astype(jnp.bfloat16).astype(jnp.float32)
    ref_bf16 = jnp.maximum(
        jax.lax.conv_general_dilated(
            xb, wb, window_strides=(1, 1), padding=((1, 1), (1, 1)),
            dimension_numbers=("NCHW", "OIHW", "NCHW")), 0.0)
    assert jnp.allclose(out, ref_bf16, atol=2e-3, rtol=2e-3), "mismatch vs bf16-rounded reference"

    print("KERNEL_OK")
</pallas_src>

<mosaic_0001>
module attributes {stable_mosaic.version = 11 : i64} {
  func.func @conv_relu_kernel(%arg0: i32, %arg1: memref<1x18x64xbf16, #tpu.memory_space<vmem>>, %arg2: memref<3x64x128xbf16, #tpu.memory_space<vmem>>, %arg3: memref<1x16x128xf32, #tpu.memory_space<vmem>>) attributes {dimension_semantics = [#tpu.dimension_semantics<parallel>], iteration_bounds = array<i64: 2>, scalar_prefetch = 0 : i64, scratch_operands = 0 : i64, tpu.core_type = #tpu.core_type<tc>, window_params = [{transform_indices = @transform_0, window_bounds = array<i64: 1, 18, 64>}, {pipeline_mode = #tpu.pipeline_mode<synchronous>, transform_indices = @transform_1, window_bounds = array<i64: 3, 64, 128>}, {transform_indices = @transform_2, window_bounds = array<i64: 1, 16, 128>}]} {
    %c0 = arith.constant 0 : index
    %c0_0 = arith.constant 0 : index
    %c0_1 = arith.constant 0 : index
    %0 = vector.load %arg1[%c0, %c0_0, %c0_1] : memref<1x18x64xbf16, #tpu.memory_space<vmem>>, vector<1x16x64xbf16>
    %1 = vector.shape_cast %0 : vector<1x16x64xbf16> to vector<16x64xbf16>
    %c0_2 = arith.constant 0 : index
    %c0_3 = arith.constant 0 : index
    %c0_4 = arith.constant 0 : index
    %2 = vector.load %arg2[%c0_2, %c0_3, %c0_4] : memref<3x64x128xbf16, #tpu.memory_space<vmem>>, vector<1x64x128xbf16>
    %3 = vector.shape_cast %2 : vector<1x64x128xbf16> to vector<64x128xbf16>
    %cst = arith.constant dense<0.000000e+00> : vector<16x128xf32>
    %4 = tpu.matmul %1, %3, %cst {dimension_numbers = #tpu.dot_dimension_numbers<[1], [0], [0], [1], [0, 0, 1, 1], [], []>} : vector<16x64xbf16>, vector<64x128xbf16>, vector<16x128xf32> -> vector<16x128xf32>
    %c0_5 = arith.constant 0 : index
    %c1 = arith.constant 1 : index
    %c0_6 = arith.constant 0 : index
    %5 = vector.load %arg1[%c0_5, %c1, %c0_6] : memref<1x18x64xbf16, #tpu.memory_space<vmem>>, vector<1x16x64xbf16>
    %6 = vector.shape_cast %5 : vector<1x16x64xbf16> to vector<16x64xbf16>
    %c1_7 = arith.constant 1 : index
    %c0_8 = arith.constant 0 : index
    %c0_9 = arith.constant 0 : index
    %7 = vector.load %arg2[%c1_7, %c0_8, %c0_9] : memref<3x64x128xbf16, #tpu.memory_space<vmem>>, vector<1x64x128xbf16>
    %8 = vector.shape_cast %7 : vector<1x64x128xbf16> to vector<64x128xbf16>
    %cst_10 = arith.constant dense<0.000000e+00> : vector<16x128xf32>
    %9 = tpu.matmul %6, %8, %cst_10 {dimension_numbers = #tpu.dot_dimension_numbers<[1], [0], [0], [1], [0, 0, 1, 1], [], []>} : vector<16x64xbf16>, vector<64x128xbf16>, vector<16x128xf32> -> vector<16x128xf32>
    %10 = arith.addf %4, %9 : vector<16x128xf32>
    %c0_11 = arith.constant 0 : index
    %c2 = arith.constant 2 : index
    %c0_12 = arith.constant 0 : index
    %11 = vector.load %arg1[%c0_11, %c2, %c0_12] : memref<1x18x64xbf16, #tpu.memory_space<vmem>>, vector<1x16x64xbf16>
    %12 = vector.shape_cast %11 : vector<1x16x64xbf16> to vector<16x64xbf16>
    %c2_13 = arith.constant 2 : index
    %c0_14 = arith.constant 0 : index
    %c0_15 = arith.constant 0 : index
    %13 = vector.load %arg2[%c2_13, %c0_14, %c0_15] : memref<3x64x128xbf16, #tpu.memory_space<vmem>>, vector<1x64x128xbf16>
    %14 = vector.shape_cast %13 : vector<1x64x128xbf16> to vector<64x128xbf16>
    %cst_16 = arith.constant dense<0.000000e+00> : vector<16x128xf32>
    %15 = tpu.matmul %12, %14, %cst_16 {dimension_numbers = #tpu.dot_dimension_numbers<[1], [0], [0], [1], [0, 0, 1, 1], [], []>} : vector<16x64xbf16>, vector<64x128xbf16>, vector<16x128xf32> -> vector<16x128xf32>
    %16 = arith.addf %10, %15 : vector<16x128xf32>
    %cst_17 = arith.constant 0.000000e+00 : f32
    %17 = vector.broadcast %cst_17 : f32 to vector<16x128xf32>
    %18 = arith.maximumf %16, %17 : vector<16x128xf32>
    %c0_18 = arith.constant 0 : index
    %c0_19 = arith.constant 0 : index
    %c0_20 = arith.constant 0 : index
    %19 = vector.load %arg3[%c0_18, %c0_19, %c0_20] : memref<1x16x128xf32, #tpu.memory_space<vmem>>, vector<1x16x128xf32>
    %20 = vector.shape_cast %19 : vector<1x16x128xf32> to vector<16x128xf32>
    %21 = vector.shape_cast %18 : vector<16x128xf32> to vector<1x16x128xf32>
    tpu.vector_store %arg3[%c0_18, %c0_19, %c0_20], %21 {strides = array<i32>} : memref<1x16x128xf32, #tpu.memory_space<vmem>>, vector<1x16x128xf32>,
    return
  }
  func.func @transform_0(%arg0: i32) -> (i32, i32, i32) {
    %c0_i32 = arith.constant 0 : i32
    %c0_i32_0 = arith.constant 0 : i32
    %c0_i32_1 = arith.constant 0 : i32
    return %arg0, %c0_i32, %c0_i32_0 : i32, i32, i32
  }
  func.func @transform_1(%arg0: i32) -> (i32, i32, i32) {
    %c0_i32 = arith.constant 0 : i32
    %c0_i32_0 = arith.constant 0 : i32
    %c0_i32_1 = arith.constant 0 : i32
    %c0_i32_2 = arith.constant 0 : i32
    return %c0_i32, %c0_i32_0, %c0_i32_1 : i32, i32, i32
  }
  func.func @transform_2(%arg0: i32) -> (i32, i32, i32) {
    %c0_i32 = arith.constant 0 : i32
    %c0_i32_0 = arith.constant 0 : i32
    %c0_i32_1 = arith.constant 0 : i32
    return %arg0, %c0_i32, %c0_i32_0 : i32, i32, i32
  }
}

</mosaic_0001>

<llo_original>
// kernel: _forward.1
$region0: #{_forward.1}
  #allocation0 [shape = 'u32[]', space=smem, size = 0x4, offset = 0x4, fixed_abs, tag = 'smem constant byte address 0x4 - core index']
  #allocation1 [shape = 'u32[72,128]{1,0:T(1,128)}', space=vmem, size = 0x9000, scoped, tag = 'internal scratch']
  %s0 = inlined_call_operand.vmem [shape: bf16[2,18,64], index: 0, kind: input, shape index: {}]
  %s1 = inlined_call_operand.vmem [shape: bf16[3,64,128], index: 1, kind: input, shape index: {}]
  %s2 = inlined_call_operand.vmem [shape: f32[2,16,128], index: 2, kind: output, shape index: {}]
  %s3 = sld [smem:[#allocation0]]
  $region41: #{_forward.1} parent=0
    _
  %s5 = ssub.s32 1, %s3
  %s6 = scalar_select 0, %s5, %s3
  loop: start=0, step=1, limit=4
  $region2: #{_forward.1} parent=0 // loop_pre_header
    _
  $region3: #{_forward.1} parent=0 // loop_header
    %s8 = sphi 0, %s12
    %p9 = scmp.ge.s32.totalorder %s8, 4
    %s18 = sphi 0, %s20
    %s21 = sphi 0, %s18
    %s22 = sphi 0, %s21
    %s38 = sphi 0, %s22
    %s42 = sphi 0, %s42
    %s44 = sphi 0, %s42
    %s45 = sphi 0, %s44
    %s59 = sphi 0, %s45
    %s65 = sphi 0, %s67
    %s68 = sphi 0, %s65
    %s69 = sphi 0, %s68
    %s85 = sphi 0, %s69
  $region4: #{_forward.1} parent=0 // loop_header_branch
    %11 = sbr.rel (%p9) target = $region8
  $region5: #{_forward.1} parent=0 // loop_body
    %s13 = ssub.s32 %s8, 1
    %s14 = ssub.s32 %s8, 2
    %s15 = sadd.s32 %s8, 1
    %s16 = ssub.s32 %s8, %s15
    %p17 = scmp.eq.s32.totalorder %s16, 0
    %s19 = sadd.s32 %s18, 1
    %s20 = scalar_select %p17, %s18, %s19
    %p23 = pneg %p17
    %p24 = scmp.eq.s32.totalorder %s8, 1
    %p25 = por %p23, %p24
    %p26 = scmp.ne.s32.totalorder %s18, %s21
    %p27 = scmp.eq.s32.totalorder %s8, 0
    %p28 = por %p26, %p27
    %p29 = scmp.ne.s32.totalorder %s18, %s21
    %p30 = scmp.eq.s32.totalorder %s13, 1
    %p31 = por %p29, %p30
    %p32 = scmp.ne.s32.totalorder %s21, %s22
    %p33 = scmp.eq.s32.totalorder %s13, 0
    %p34 = por %p32, %p33
    %p35 = scmp.ne.s32.totalorder %s21, %s22
    %p36 = scmp.eq.s32.totalorder %s14, 1
    %p37 = por %p35, %p36
    %p39 = scmp.ne.s32.totalorder %s22, %s38
    %p40 = scmp.eq.s32.totalorder %s14, 0
    %p41 = por %p39, %p40
    %s43 = sadd.s32 %s42, 1
    %p46 = scmp.eq.s32.totalorder %s8, 1
    %p47 = scmp.ne.s32.totalorder %s42, %s44
    %p48 = scmp.eq.s32.totalorder %s8, 0
    %p49 = por %p47, %p48
    %p50 = scmp.ne.s32.totalorder %s42, %s44
    %p51 = scmp.eq.s32.totalorder %s13, 1
    %p52 = por %p50, %p51
    %p53 = scmp.ne.s32.totalorder %s44, %s45
    %p54 = scmp.eq.s32.totalorder %s13, 0
    %p55 = por %p53, %p54
    %p56 = scmp.ne.s32.totalorder %s44, %s45
    %p57 = scmp.eq.s32.totalorder %s14, 1
    %p58 = por %p56, %p57
    %p60 = scmp.ne.s32.totalorder %s45, %s59
    %p61 = scmp.eq.s32.totalorder %s14, 0
    %p62 = por %p60, %p61
    %s63 = ssub.s32 %s8, %s15
    %p64 = scmp.eq.s32.totalorder %s63, 0
    %s66 = sadd.s32 %s65, 1
    %s67 = scalar_select %p64, %s65, %s66
    %p70 = pneg %p64
    %p71 = scmp.eq.s32.totalorder %s8, 1
    %p72 = por %p70, %p71
    %p73 = scmp.ne.s32.totalorder %s65, %s68
    %p74 = scmp.eq.s32.totalorder %s8, 0
    %p75 = por %p73, %p74
    %p76 = scmp.ne.s32.totalorder %s65, %s68
    %p77 = scmp.eq.s32.totalorder %s13, 1
    %p78 = por %p76, %p77
    %p79 = scmp.ne.s32.totalorder %s68, %s69
    %p80 = scmp.eq.s32.totalorder %s13, 0
    %p81 = por %p79, %p80
    %p82 = scmp.ne.s32.totalorder %s68, %s69
    %p83 = scmp.eq.s32.totalorder %s14, 1
    %p84 = por %p82, %p83
    %p86 = scmp.ne.s32.totalorder %s69, %s85
    %p87 = scmp.eq.s32.totalorder %s14, 0
    %p88 = por %p86, %p87
    %p89 = scmp.le.s32.totalorder 1, %s8
    %p90 = scmp.lt.s32.totalorder %s8, 3
    %p91 = pnand %p89, %p90
    %p92 = pneg %p91
    // Predicated region
    $region9: #{_forward.1} parent=5 // pred_check
      _
    $region10: #{_forward.1} parent=5 // pred_check_branch
      %94 = sbr.rel (%p91) target = $region12
    $region11: #{_forward.1} parent=5 // pred_region
      %s95 = ssub.s32 %s8, 1
      // Predicated region
      $region13: #{_forward.1} parent=11 // pred_check
        %p96 = pneg %p55
      $region14: #{_forward.1} parent=11 // pred_check_branch
        %98 = sbr.rel (%p96) target = $region16
      $region15: #{_forward.1} parent=11 // pred_region
        _
      $region16: #{_forward.1} parent=11 // pred_fallthru
        _
    $region12: #{_forward.1} parent=5 // pred_fallthru
      _
    %p99 = scmp.lt.s32.totalorder %s8, 2
    // Predicated region
    $region17: #{_forward.1} parent=5 // pred_check
      %p100 = pneg %p99
    $region18: #{_forward.1} parent=5 // pred_check_branch
      %102 = sbr.rel (%p100) target = $region20
    $region19: #{_forward.1} parent=5 // pred_region
      // Predicated region
      $region21: #{_forward.1} parent=19 // pred_check
        %p103 = pneg %p28
      $region22: #{_forward.1} parent=19 // pred_check_branch
        %105 = sbr.rel (%p103) target = $region24
      $region23: #{_forward.1} parent=19 // pred_region
        %p106 = scmp.lt.s32.totalorder %s8, 1
        %s107 = scalar_select %p106, %s8, 1
        %s108 = smul.addr %s107, 3
        %s109 = smul.addr %s108, 4
        %s110 = scalar_lea.vmem %s0, %s109
      $region24: #{_forward.1} parent=19 // pred_fallthru
        _
    $region20: #{_forward.1} parent=5 // pred_fallthru
      _
    %p111 = scmp.le.s32.totalorder 1, %s8
    %p112 = scmp.lt.s32.totalorder %s8, 3
    %p113 = pnand %p111, %p112
    %p114 = pneg %p113
    // Predicated region
    $region25: #{_forward.1} parent=5 // pred_check
      _
    $region26: #{_forward.1} parent=5 // pred_check_branch
      %116 = sbr.rel (%p113) target = $region28
    $region27: #{_forward.1} parent=5 // pred_region
      %s117 = ssub.s32 %s8, 1
      %p118 = scmp.lt.s32.totalorder %s13, 1
      %s119 = scalar_select %p118, %s13, 1
      %s120 = smul.addr %s119, 3
      %s121 = smul.addr %s120, 4
      %s122 = scalar_lea.vmem %s0, %s121
      %p123 = pneg %p34
      %p124 = pneg %p31
      %p125 = pneg %p55
      %p126 = pneg %p52
      %p127 = pneg %p81
      %p128 = pneg %p78
      %p129 = scmp.lt.s32.totalorder %s13, 1
      %s130 = scalar_select %p129, %s13, 1
      %s131 = smul.addr %s130, 2
      %s132 = smul.addr %s131, 8
      %s133 = scalar_lea.vmem %s2, %s132
      %p134 = scmp.lt.s32.totalorder %s13, 1
      %s135 = scalar_select %p134, %s13, 1
      %s136 = smul.addr %s135, 3
      %s137 = smul.addr %s136, 4
      %s138 = scalar_lea.vmem %s0, %s137
      %p139 = scmp.lt.s32.totalorder %s13, 1
      %s140 = scalar_select %p139, %s13, 1
      %s141 = smul.addr %s140, 2
      %s142 = smul.addr %s141, 8
      %s143 = scalar_lea.vmem %s2, %s142
      %v145 = vld [vmem:[%s138] sm:$0xf]
      %v146 = vld [vmem:[%s138 + $0x4] sm:$0xf]
      %v147 = vld [vmem:[%s1] sm:$0xf]
      %v148 = vld [vmem:[%s1 + $0x4] sm:$0xf]
      %v149 = vld [vmem:[%s1 + $0x8] sm:$0xf]
      %v150 = vld [vmem:[%s1 + $0xc] sm:$0xf]
      %v151 = vld [vmem:[%s1 + $0x10] sm:$0xf]
      %v152 = vld [vmem:[%s1 + $0x14] sm:$0xf]
      %v153 = vld [vmem:[%s1 + $0x18] sm:$0xf]
      %v154 = vld [vmem:[%s1 + $0x1c] sm:$0xf]
      %v155 = vld [vmem:[%s138 + $0x8] sm:$0x1]
      %s156 = scalar_lea.vmem %s1, 32
      %v157 = vld [vmem:[%s156] sm:$0xf]
      %v158 = vld [vmem:[%s156 + $0x4] sm:$0xf]
      %v159 = vld [vmem:[%s156 + $0x8] sm:$0xf]
      %v160 = vld [vmem:[%s156 + $0xc] sm:$0xf]
      %v161 = vld [vmem:[%s156 + $0x10] sm:$0xf]
      %v162 = vld [vmem:[%s156 + $0x14] sm:$0xf]
      %v163 = vld [vmem:[%s156 + $0x18] sm:$0xf]
      %v164 = vld [vmem:[%s156 + $0x1c] sm:$0xf]
      %v168 = vunpack.c.l.b16 %v145
      %v169 = vunpack.c.l.b16 %v146
      %v170 = vunpack.c.l.b16 %v155
      %v171 = vpack.c.b16 %v169, %v168
      %v172 = vpack.c.b16 %v170, %v170
      %vm173 = vsmask.f32 7424
      %v175 = vshrl.u32 %v171, 16
      %v177 = vshll.u32 %v171, 16
      %v179 = vrot.slane %v177, 1
      %v180 = vor.u32 %v175, %v179
      %v182 = vshll.u32 %v172, 16
      %v184 = vrot.slane %v182, 1
      %v185 = vsel %vm173, %v180, %v184
      %v194 = vunpack.c.l.b16 %v157
      %v195 = vunpack.c.l.b16 %v158
      %v196 = vunpack.c.l.b16 %v159
      %v197 = vunpack.c.l.b16 %v160
      %v198 = vunpack.c.l.b16 %v161
      %v199 = vunpack.c.l.b16 %v162
      %v200 = vunpack.c.l.b16 %v163
      %v201 = vunpack.c.l.b16 %v164
      %v202 = vpack.c.b16 %v195, %v194
      %v203 = vpack.c.b16 %v197, %v196
      %v204 = vpack.c.b16 %v199, %v198
      %v205 = vpack.c.b16 %v201, %v200
      %vm210 = vcmask 523264
      %v212 = vsel %vm210, %v185, 0
      %214 = vmatpush.bf16.msra.mxu0 0
      %215 = vmatpush.bf16.msra.mxu0 0
      %216 = vmatpush.bf16.msra.mxu0 0
      %217 = vmatpush.bf16.msra.mxu0 0
      %218 = vmatpush.bf16.msra.mxu0 %v205
      %219 = vmatpush.bf16.msra.mxu0 %v204
      %220 = vmatpush.bf16.msra.mxu0 %v203
      %221 = vmatpush.bf16.msra.mxu0 %v202
      %222 = vmatmul.bf16.gmra.mxu0 %v212
      %v223 = vpop.f32.mrf.mxu0
      %v224 = vadd.f32 0.0, %v223
      %v225 = vpop.f32.mrf.mxu0
      %v226 = vadd.f32 0.0, %v225
      %227 = vdwg.mxu0
      %v236 = vunpack.c.l.b16 %v147
      %v237 = vunpack.c.l.b16 %v148
      %v238 = vunpack.c.l.b16 %v149
      %v239 = vunpack.c.l.b16 %v150
      %v240 = vunpack.c.l.b16 %v151
      %v241 = vunpack.c.l.b16 %v152
      %v242 = vunpack.c.l.b16 %v153
      %v243 = vunpack.c.l.b16 %v154
      %v244 = vpack.c.b16 %v237, %v236
      %v245 = vpack.c.b16 %v239, %v238
      %v246 = vpack.c.b16 %v241, %v240
      %v247 = vpack.c.b16 %v243, %v242
      %v252 = vsel %vm210, %v171, 0
      %254 = vmatpush.bf16.msra.mxu0 0
      %255 = vmatpush.bf16.msra.mxu0 0
      %256 = vmatpush.bf16.msra.mxu0 0
      %257 = vmatpush.bf16.msra.mxu0 0
      %258 = vmatpush.bf16.msra.mxu0 %v247
      %259 = vmatpush.bf16.msra.mxu0 %v246
      %260 = vmatpush.bf16.msra.mxu0 %v245
      %261 = vmatpush.bf16.msra.mxu0 %v244
      %262 = vmatmul.bf16.gmra.mxu0 %v252
      %v263 = vpop.f32.mrf.mxu0
      %v264 = vadd.f32 %v224, %v263
      %v265 = vpop.f32.mrf.mxu0
      %v266 = vadd.f32 %v226, %v265
      %267 = vdwg.mxu0
      %v268 = vld [vmem:[%s138] sm:$0xe]
      %s269 = scalar_lea.vmem %s1, 64
      %v270 = vld [vmem:[%s269] sm:$0xf]
      %v271 = vld [vmem:[%s269 + $0x4] sm:$0xf]
      %v272 = vld [vmem:[%s269 + $0x8] sm:$0xf]
      %v273 = vld [vmem:[%s269 + $0xc] sm:$0xf]
      %v274 = vld [vmem:[%s269 + $0x10] sm:$0xf]
      %v275 = vld [vmem:[%s269 + $0x14] sm:$0xf]
      %v276 = vld [vmem:[%s269 + $0x18] sm:$0xf]
      %v277 = vld [vmem:[%s269 + $0x1c] sm:$0xf]
      %v279 = vunpack.c.l.b16 %v268
      %v280 = vpack.c.b16 %v169, %v279
      %vm281 = vcmask 1046528
      %v282 = vrot.slane %v280, 1
      %v283 = vrot.slane %v172, 1
      %v284 = vsel %vm281, %v282, %v283
      %v293 = vunpack.c.l.b16 %v270
      %v294 = vunpack.c.l.b16 %v271
      %v295 = vunpack.c.l.b16 %v272
      %v296 = vunpack.c.l.b16 %v273
      %v297 = vunpack.c.l.b16 %v274
      %v298 = vunpack.c.l.b16 %v275
      %v299 = vunpack.c.l.b16 %v276
      %v300 = vunpack.c.l.b16 %v277
      %v301 = vpack.c.b16 %v294, %v293
      %v302 = vpack.c.b16 %v296, %v295
      %v303 = vpack.c.b16 %v298, %v297
      %v304 = vpack.c.b16 %v300, %v299
      %v310 = vsel %vm210, %v284, 0
      %312 = vmatpush.bf16.msra.mxu0 0
      %313 = vmatpush.bf16.msra.mxu0 0
      %314 = vmatpush.bf16.msra.mxu0 0
      %315 = vmatpush.bf16.msra.mxu0 0
      %316 = vmatpush.bf16.msra.mxu0 %v304
      %317 = vmatpush.bf16.msra.mxu0 %v303
      %318 = vmatpush.bf16.msra.mxu0 %v302
      %319 = vmatpush.bf16.msra.mxu0 %v301
      %320 = vmatmul.bf16.gmra.mxu0 %v310
      %v321 = vpop.f32.mrf.mxu0
      %v322 = vadd.f32 0.0, %v321
      %v323 = vpop.f32.mrf.mxu0
      %v324 = vadd.f32 0.0, %v323
      %325 = vdwg.mxu0
      %v326 = vadd.f32 %v264, %v322
      %v327 = vadd.f32 %v266, %v324
      %v328 = vmax.f32 %v326, 0.0
      %v329 = vmax.f32 %v327, 0.0
      %330 = vst [vmem:[%s143] sm:$0xff] %v328
      %331 = vst [vmem:[%s143 + $0x8] sm:$0xff] %v329
      %p332 = scmp.lt.s32.totalorder %s13, 1
      %s333 = scalar_select %p332, %s13, 1
      %s334 = smul.addr %s333, 2
      %s335 = smul.addr %s334, 8
      %s336 = scalar_lea.vmem %s2, %s335
      // Predicated region
      $region29: #{_forward.1} parent=27 // pred_check
        %p337 = pneg %p78
      $region30: #{_forward.1} parent=27 // pred_check_branch
        %339 = sbr.rel (%p337) target = $region32
      $region31: #{_forward.1} parent=27 // pred_region
        _
      $region32: #{_forward.1} parent=27 // pred_fallthru
        _
    $region28: #{_forward.1} parent=5 // pred_fallthru
      _
    %p340 = scmp.le.s32.totalorder 2, %s8
    // Predicated region
    $region33: #{_forward.1} parent=5 // pred_check
      %p341 = pneg %p340
    $region34: #{_forward.1} parent=5 // pred_check_branch
      %343 = sbr.rel (%p341) target = $region36
    $region35: #{_forward.1} parent=5 // pred_region
      %s344 = ssub.s32 %s8, 2
      // Predicated region
      $region37: #{_forward.1} parent=35 // pred_check
        %p345 = pneg %p84
      $region38: #{_forward.1} parent=35 // pred_check_branch
        %347 = sbr.rel (%p345) target = $region40
      $region39: #{_forward.1} parent=35 // pred_region
        %p348 = scmp.lt.s32.totalorder %s14, 1
        %s349 = scalar_select %p348, %s14, 1
        %s350 = smul.addr %s349, 2
        %s351 = smul.addr %s350, 8
        %s352 = scalar_lea.vmem %s2, %s351
      $region40: #{_forward.1} parent=35 // pred_fallthru
        _
    $region36: #{_forward.1} parent=5 // pred_fallthru
      _
  $region6: #{_forward.1} parent=0 // loop_footer
    %s12 = sadd.s32 1, %s8
  $region7: #{_forward.1} parent=0 // loop_footer_branch
    %7 = sbr.rel target = $region3
  $region8: #{_forward.1} parent=0 // loop_exit
    _

</llo_original>
